<compile_context>
chip_gen: v6e
topology: v6e:2x2x1
jax: 0.10.0
libtpu: 0.0.40
codegen_flags: <defaults>
</compile_context>

<pallas_src>
import math

import jax
import jax.numpy as jnp
from jax.experimental import pallas as pl
from jax.experimental.pallas import tpu as pltpu


def _round_up(x, m):
    return ((x + m - 1) // m) * m


# ---------------------------------------------------------------------------
# Kernel: one (batch-tile, hidden-chunk) grid step of
#   out = relu(x @ W1 + b1) @ W2 + b2        (dropout = eval mode identity)
# Hidden is the reduction grid axis; acc_ref persists across it.
# ---------------------------------------------------------------------------
def _mlp_kernel(x_ref, w1_ref, b1_ref, w2_ref, b2_ref, o_ref, acc_ref):
    k = pl.program_id(1)

    @pl.when(k == 0)
    def _init():
        acc_ref[...] = jnp.zeros_like(acc_ref)

    # hid chunk = relu(x @ W1[:, chunk] + b1[chunk]); bf16 operands, f32 accum.
    h = jnp.dot(x_ref[...], w1_ref[...], preferred_element_type=jnp.float32)
    h = jnp.maximum(h + b1_ref[...], 0.0)
    # TODO(synk): training-mode dropout (prng mask) would go here.
    acc_ref[...] += jnp.dot(h.astype(w2_ref.dtype), w2_ref[...],
                            preferred_element_type=jnp.float32)

    @pl.when(k == pl.num_programs(1) - 1)
    def _finalize():
        o_ref[...] = (acc_ref[...] + b2_ref[...]).astype(o_ref.dtype)


# ---------------------------------------------------------------------------
# One-time parameter preparation (hoisted out of the forward pass).
# ---------------------------------------------------------------------------
def prepare_params(w1, b1, w2, b2, *, param_dtype=jnp.bfloat16):
    """w1: [in, hidden], b1: [hidden], w2: [hidden, out], b2: [out]."""
    in_size, hidden = w1.shape
    out_size = w2.shape[1]
    hid_p = _round_up(hidden, 128)
    out_p = _round_up(out_size, 128)

    w1p = jnp.zeros((in_size, hid_p), param_dtype).at[:, :hidden].set(
        w1.astype(param_dtype))
    b1p = jnp.zeros((1, hid_p), jnp.float32).at[0, :hidden].set(
        b1.astype(jnp.float32))
    w2p = jnp.zeros((hid_p, out_p), param_dtype).at[:hidden, :out_size].set(
        w2.astype(param_dtype))
    b2p = jnp.zeros((1, out_p), jnp.float32).at[0, :out_size].set(
        b2.astype(jnp.float32))

    meta = dict(in_size=in_size, hidden=hidden, out_size=out_size,
                hid_p=hid_p, out_p=out_p)
    return (w1p, b1p, w2p, b2p), meta


# ---------------------------------------------------------------------------
# Forward
# ---------------------------------------------------------------------------
def _vmem_need_bytes(TM, in_sz, TK, out_p, out_isz, n_k):
    wbuf = 1 if n_k == 1 else 2             # weight buffer count we request
    need = 2 * TM * in_sz * 2               # x tiles (bf16, double-buffered)
    need += 2 * TM * out_p * out_isz        # out tiles (double-buffered)
    need += wbuf * in_sz * TK * 2           # W1 chunk(s) (bf16)
    need += wbuf * TK * out_p * 2           # W2 chunk(s) (bf16)
    need += wbuf * (TK + out_p) * 4         # biases (f32)
    need += TM * out_p * 4                  # accumulator scratch (f32)
    need += TM * TK * 6                     # live h: f32 + bf16 copy
    return need


def _build_call(Bk, in_size, hid_p, out_p, TM, TK, out_dtype, vmem_limit,
                single_buffer_weights, flops, bytes_accessed):
    grid_m = pl.cdiv(Bk, TM)
    grid_k = hid_p // TK

    def wspec(shape, index_map):
        if single_buffer_weights:
            return pl.BlockSpec(shape, index_map, pipeline_mode=pl.Buffered(1))
        return pl.BlockSpec(shape, index_map)

    grid_spec = pltpu.PrefetchScalarGridSpec(
        num_scalar_prefetch=0,
        grid=(grid_m, grid_k),
        in_specs=[
            pl.BlockSpec((TM, in_size), lambda i, k: (i, 0)),   # x (batch-tiled)
            wspec((in_size, TK), lambda i, k: (0, k)),          # W1 chunk
            wspec((1, TK), lambda i, k: (0, k)),                # b1 chunk
            wspec((TK, out_p), lambda i, k: (k, 0)),            # W2 chunk
            wspec((1, out_p), lambda i, k: (0, 0)),             # b2
        ],
        out_specs=pl.BlockSpec((TM, out_p), lambda i, k: (i, 0)),
        scratch_shapes=[pltpu.VMEM((TM, out_p), jnp.float32)],
    )
    return pl.pallas_call(
        _mlp_kernel,
        out_shape=jax.ShapeDtypeStruct((Bk, out_p), out_dtype),
        grid_spec=grid_spec,
        compiler_params=pltpu.CompilerParams(
            dimension_semantics=("parallel", "arbitrary"),
            vmem_limit_bytes=int(vmem_limit)),
        cost_estimate=pl.CostEstimate(
            flops=int(flops), transcendentals=0,
            bytes_accessed=int(bytes_accessed)),
    )


def classification_forward(x, padded_params, meta, *, tm_target=512,
                           out_dtype=None):
    """x: [B, in_size]; padded_params/meta from prepare_params()."""
    w1p, b1p, w2p, b2p = padded_params
    in_size, out_size = meta["in_size"], meta["out_size"]
    hid_p, out_p = meta["hid_p"], meta["out_p"]
    assert x.shape[1] == in_size

    if out_dtype is None:
        out_dtype = x.dtype if x.dtype in (jnp.bfloat16, jnp.float32) else jnp.float32
    out_isz = 2 if out_dtype == jnp.bfloat16 else 4

    B = x.shape[0]
    x_in = x.astype(jnp.bfloat16)
    if B < 8:                                # tiny-batch edge: one sublane min
        x_in = jnp.pad(x_in, ((0, 8 - B), (0, 0)))
    Bk = x_in.shape[0]

    # Batch tile: amortize grid-step overhead / fill 256-wide MXU M dim, but
    # keep >=2 tiles for large B so v7x's second TensorCore is used.
    TM = min(tm_target, max(8, (Bk // 8) * 8))
    if Bk > 256 and pl.cdiv(Bk, TM) < 2:
        TM = _round_up(pl.cdiv(Bk, 2), 8)

    # Generation-aware VMEM budget (~75% of physical capacity).
    try:
        vmem_cap = pltpu.get_tpu_info().vmem_capacity_bytes
    except Exception:
        vmem_cap = 64 << 20                  # conservative: v7x per-TC VMEM
    vmem_budget = int(0.75 * vmem_cap)

    # Hidden chunk: largest 128-multiple divisor of hid_p fitting the budget
    # (TK == hid_p keeps both weight matrices fully VMEM-resident).
    TK = 128
    for cand in range(hid_p, 127, -128):
        if hid_p % cand:
            continue
        if _vmem_need_bytes(TM, in_size, cand, out_p, out_isz,
                            hid_p // cand) <= vmem_budget:
            TK = cand
            break
    grid_k = hid_p // TK
    single_buffer_weights = grid_k == 1

    flops = 2 * Bk * in_size * hid_p + 2 * Bk * hid_p * out_p
    bytes_accessed = (x_in.size * 2 + w1p.size * 2 + w2p.size * 2
                      + (b1p.size + b2p.size) * 4 + Bk * out_p * out_isz)

    def run(single_buf):
        call = _build_call(Bk, in_size, hid_p, out_p, TM, TK, out_dtype,
                           vmem_budget, single_buf, flops, bytes_accessed)
        return call(x_in, w1p, b1p, w2p, b2p)

    try:
        out_padded = run(single_buffer_weights)
    except Exception:
        if not single_buffer_weights:
            raise
        out_padded = run(False)              # retry with default buffering

    return out_padded[:B, :out_size].astype(x.dtype)


# ---------------------------------------------------------------------------
# Init helpers matching the PyTorch module
# ---------------------------------------------------------------------------
def xavier_uniform(key, fan_in, fan_out, dtype=jnp.float32):
    # torch.nn.init.xavier_uniform_ (gain=1); stored as (in, out) = W.T.
    bound = math.sqrt(6.0 / (fan_in + fan_out))
    return jax.random.uniform(key, (fan_in, fan_out), dtype,
                              minval=-bound, maxval=bound)


def linear_bias_init(key, fan_in, n, dtype=jnp.float32):
    # torch.nn.Linear default bias init: U(-1/sqrt(fan_in), 1/sqrt(fan_in)).
    bound = 1.0 / math.sqrt(fan_in)
    return jax.random.uniform(key, (n,), dtype, minval=-bound, maxval=bound)


if __name__ == "__main__":
    batch, in_size, hidden_size, out_size = 8, 32, 64, 16

    key = jax.random.PRNGKey(0)
    k_x, k_w1, k_b1, k_w2, k_b2 = jax.random.split(key, 5)

    x = jax.random.normal(k_x, (batch, in_size), jnp.float32)
    w1 = xavier_uniform(k_w1, in_size, hidden_size)
    b1 = linear_bias_init(k_b1, in_size, hidden_size)
    w2 = xavier_uniform(k_w2, hidden_size, out_size)
    b2 = linear_bias_init(k_b2, hidden_size, out_size)

    # Parameters are padded / cast once, outside the forward pass.
    params, meta = prepare_params(w1, b1, w2, b2)

    out = classification_forward(x, params, meta)
    out = jax.block_until_ready(out)
    assert out.shape == (batch, out_size)

    # Reference with matching bf16-operand / f32-accumulate numerics.
    h_ref = jnp.maximum(
        jnp.dot(x.astype(jnp.bfloat16), w1.astype(jnp.bfloat16),
                preferred_element_type=jnp.float32) + b1, 0.0)
    ref = jnp.dot(h_ref.astype(jnp.bfloat16), w2.astype(jnp.bfloat16),
                  preferred_element_type=jnp.float32) + b2
    assert jnp.allclose(out, ref, atol=2e-2, rtol=2e-2)

    # Sanity-check against pure-f32 math (looser tolerance for bf16 operands).
    ref_f32 = jnp.maximum(x @ w1 + b1, 0.0) @ w2 + b2
    assert jnp.allclose(out, ref_f32, atol=5e-2, rtol=5e-2)

    print("KERNEL_OK")
</pallas_src>

<mosaic_0001>
module attributes {stable_mosaic.version = 11 : i64} {
  func.func @_mlp_kernel(%arg0: i32, %arg1: i32, %arg2: memref<8x32xbf16, #tpu.memory_space<vmem>>, %arg3: memref<32x128xbf16, #tpu.memory_space<vmem>>, %arg4: memref<1x128xf32, #tpu.memory_space<vmem>>, %arg5: memref<128x128xbf16, #tpu.memory_space<vmem>>, %arg6: memref<1x128xf32, #tpu.memory_space<vmem>>, %arg7: memref<8x128xf32, #tpu.memory_space<vmem>>, %arg8: memref<8x128xf32, #tpu.memory_space<vmem>>) attributes {dimension_semantics = [#tpu.dimension_semantics<parallel>, #tpu.dimension_semantics<arbitrary>], iteration_bounds = array<i64: 1, 1>, scalar_prefetch = 0 : i64, scratch_operands = 1 : i64, tpu.core_type = #tpu.core_type<tc>, window_params = [{transform_indices = @transform_0, window_bounds = array<i64: 8, 32>}, {pipeline_mode = #tpu.pipeline_mode<synchronous>, transform_indices = @transform_1, window_bounds = array<i64: 32, 128>}, {pipeline_mode = #tpu.pipeline_mode<synchronous>, transform_indices = @transform_2, window_bounds = array<i64: 1, 128>}, {pipeline_mode = #tpu.pipeline_mode<synchronous>, transform_indices = @transform_3, window_bounds = array<i64: 128, 128>}, {pipeline_mode = #tpu.pipeline_mode<synchronous>, transform_indices = @transform_4, window_bounds = array<i64: 1, 128>}, {transform_indices = @transform_5, window_bounds = array<i64: 8, 128>}]} {
    %c0_i32 = arith.constant 0 : i32
    %0 = arith.cmpi eq, %arg1, %c0_i32 : i32
    %1 = arith.extui %0 : i1 to i32
    %c0_i32_0 = arith.constant 0 : i32
    %2 = arith.cmpi ne, %1, %c0_i32_0 : i32
    scf.if %2 {
      %cst_16 = arith.constant 0.000000e+00 : f32
      %20 = vector.broadcast %cst_16 : f32 to vector<8x128xf32>
      %c0_17 = arith.constant 0 : index
      %c0_18 = arith.constant 0 : index
      %21 = vector.load %arg8[%c0_17, %c0_18] : memref<8x128xf32, #tpu.memory_space<vmem>>, vector<8x128xf32>
      tpu.vector_store %arg8[%c0_17, %c0_18], %20 {strides = array<i32>} : memref<8x128xf32, #tpu.memory_space<vmem>>, vector<8x128xf32>,
    } else {
    }
    %c0 = arith.constant 0 : index
    %c0_1 = arith.constant 0 : index
    %3 = vector.load %arg2[%c0, %c0_1] : memref<8x32xbf16, #tpu.memory_space<vmem>>, vector<8x32xbf16>
    %c0_2 = arith.constant 0 : index
    %c0_3 = arith.constant 0 : index
    %4 = vector.load %arg3[%c0_2, %c0_3] : memref<32x128xbf16, #tpu.memory_space<vmem>>, vector<32x128xbf16>
    %cst = arith.constant dense<0.000000e+00> : vector<8x128xf32>
    %5 = tpu.matmul %3, %4, %cst {dimension_numbers = #tpu.dot_dimension_numbers<[1], [0], [0], [1], [0, 0, 1, 1], [], []>} : vector<8x32xbf16>, vector<32x128xbf16>, vector<8x128xf32> -> vector<8x128xf32>
    %c0_4 = arith.constant 0 : index
    %c0_5 = arith.constant 0 : index
    %6 = vector.load %arg4[%c0_4, %c0_5] : memref<1x128xf32, #tpu.memory_space<vmem>>, vector<1x128xf32>
    %7 = vector.broadcast %6 : vector<1x128xf32> to vector<8x128xf32>
    %8 = arith.addf %5, %7 : vector<8x128xf32>
    %cst_6 = arith.constant 0.000000e+00 : f32
    %9 = vector.broadcast %cst_6 : f32 to vector<8x128xf32>
    %10 = arith.maximumf %8, %9 : vector<8x128xf32>
    %c0_7 = arith.constant 0 : index
    %c0_8 = arith.constant 0 : index
    %11 = vector.load %arg8[%c0_7, %c0_8] : memref<8x128xf32, #tpu.memory_space<vmem>>, vector<8x128xf32>
    %12 = arith.truncf %10 : vector<8x128xf32> to vector<8x128xbf16>
    %c0_9 = arith.constant 0 : index
    %c0_10 = arith.constant 0 : index
    %13 = vector.load %arg5[%c0_9, %c0_10] : memref<128x128xbf16, #tpu.memory_space<vmem>>, vector<128x128xbf16>
    %cst_11 = arith.constant dense<0.000000e+00> : vector<8x128xf32>
    %14 = tpu.matmul %12, %13, %cst_11 {dimension_numbers = #tpu.dot_dimension_numbers<[1], [0], [0], [1], [0, 0, 1, 1], [], []>} : vector<8x128xbf16>, vector<128x128xbf16>, vector<8x128xf32> -> vector<8x128xf32>
    %15 = arith.addf %11, %14 : vector<8x128xf32>
    %c0_12 = arith.constant 0 : index
    %c0_13 = arith.constant 0 : index
    %16 = vector.load %arg8[%c0_12, %c0_13] : memref<8x128xf32, #tpu.memory_space<vmem>>, vector<8x128xf32>
    tpu.vector_store %arg8[%c0_12, %c0_13], %15 {strides = array<i32>} : memref<8x128xf32, #tpu.memory_space<vmem>>, vector<8x128xf32>,
    %c0_i32_14 = arith.constant 0 : i32
    %17 = arith.cmpi eq, %arg1, %c0_i32_14 : i32
    %18 = arith.extui %17 : i1 to i32
    %c0_i32_15 = arith.constant 0 : i32
    %19 = arith.cmpi ne, %18, %c0_i32_15 : i32
    scf.if %19 {
      %c0_16 = arith.constant 0 : index
      %c0_17 = arith.constant 0 : index
      %20 = vector.load %arg8[%c0_16, %c0_17] : memref<8x128xf32, #tpu.memory_space<vmem>>, vector<8x128xf32>
      %c0_18 = arith.constant 0 : index
      %c0_19 = arith.constant 0 : index
      %21 = vector.load %arg6[%c0_18, %c0_19] : memref<1x128xf32, #tpu.memory_space<vmem>>, vector<1x128xf32>
      %22 = vector.broadcast %21 : vector<1x128xf32> to vector<8x128xf32>
      %23 = arith.addf %20, %22 : vector<8x128xf32>
      %c0_20 = arith.constant 0 : index
      %c0_21 = arith.constant 0 : index
      %24 = vector.load %arg7[%c0_20, %c0_21] : memref<8x128xf32, #tpu.memory_space<vmem>>, vector<8x128xf32>
      tpu.vector_store %arg7[%c0_20, %c0_21], %23 {strides = array<i32>} : memref<8x128xf32, #tpu.memory_space<vmem>>, vector<8x128xf32>,
    } else {
    }
    return
  }
  func.func @transform_0(%arg0: i32, %arg1: i32) -> (i32, i32) {
    %c0_i32 = arith.constant 0 : i32
    %c0_i32_0 = arith.constant 0 : i32
    return %arg0, %c0_i32 : i32, i32
  }
  func.func @transform_1(%arg0: i32, %arg1: i32) -> (i32, i32) {
    %c0_i32 = arith.constant 0 : i32
    %c0_i32_0 = arith.constant 0 : i32
    return %c0_i32, %arg1 : i32, i32
  }
  func.func @transform_2(%arg0: i32, %arg1: i32) -> (i32, i32) {
    %c0_i32 = arith.constant 0 : i32
    %c0_i32_0 = arith.constant 0 : i32
    return %c0_i32, %arg1 : i32, i32
  }
  func.func @transform_3(%arg0: i32, %arg1: i32) -> (i32, i32) {
    %c0_i32 = arith.constant 0 : i32
    %c0_i32_0 = arith.constant 0 : i32
    return %arg1, %c0_i32 : i32, i32
  }
  func.func @transform_4(%arg0: i32, %arg1: i32) -> (i32, i32) {
    %c0_i32 = arith.constant 0 : i32
    %c0_i32_0 = arith.constant 0 : i32
    %c0_i32_1 = arith.constant 0 : i32
    return %c0_i32, %c0_i32_0 : i32, i32
  }
  func.func @transform_5(%arg0: i32, %arg1: i32) -> (i32, i32) {
    %c0_i32 = arith.constant 0 : i32
    %c0_i32_0 = arith.constant 0 : i32
    return %arg0, %c0_i32 : i32, i32
  }
}

module attributes {stable_mosaic.version = 11 : i64} {
  func.func @_mlp_kernel(%arg0: i32, %arg1: i32, %arg2: memref<8x32xbf16, #tpu.memory_space<vmem>>, %arg3: memref<32x128xbf16, #tpu.memory_space<vmem>>, %arg4: memref<1x128xf32, #tpu.memory_space<vmem>>, %arg5: memref<128x128xbf16, #tpu.memory_space<vmem>>, %arg6: memref<1x128xf32, #tpu.memory_space<vmem>>, %arg7: memref<8x128xf32, #tpu.memory_space<vmem>>, %arg8: memref<8x128xf32, #tpu.memory_space<vmem>>) attributes {dimension_semantics = [#tpu.dimension_semantics<parallel>, #tpu.dimension_semantics<arbitrary>], iteration_bounds = array<i64: 1, 1>, scalar_prefetch = 0 : i64, scratch_operands = 1 : i64, tpu.core_type = #tpu.core_type<tc>, window_params = [{transform_indices = @transform_0, window_bounds = array<i64: 8, 32>}, {transform_indices = @transform_1, window_bounds = array<i64: 32, 128>}, {transform_indices = @transform_2, window_bounds = array<i64: 1, 128>}, {transform_indices = @transform_3, window_bounds = array<i64: 128, 128>}, {pipeline_mode = #tpu.pipeline_mode<synchronous>, transform_indices = @transform_4, window_bounds = array<i64: 1, 128>}, {transform_indices = @transform_5, window_bounds = array<i64: 8, 128>}]} {
    %c0_i32 = arith.constant 0 : i32
    %0 = arith.cmpi eq, %arg1, %c0_i32 : i32
    %1 = arith.extui %0 : i1 to i32
    %c0_i32_0 = arith.constant 0 : i32
    %2 = arith.cmpi ne, %1, %c0_i32_0 : i32
    scf.if %2 {
      %cst_16 = arith.constant 0.000000e+00 : f32
      %20 = vector.broadcast %cst_16 : f32 to vector<8x128xf32>
      %c0_17 = arith.constant 0 : index
      %c0_18 = arith.constant 0 : index
      %21 = vector.load %arg8[%c0_17, %c0_18] : memref<8x128xf32, #tpu.memory_space<vmem>>, vector<8x128xf32>
      tpu.vector_store %arg8[%c0_17, %c0_18], %20 {strides = array<i32>} : memref<8x128xf32, #tpu.memory_space<vmem>>, vector<8x128xf32>,
    } else {
    }
    %c0 = arith.constant 0 : index
    %c0_1 = arith.constant 0 : index
    %3 = vector.load %arg2[%c0, %c0_1] : memref<8x32xbf16, #tpu.memory_space<vmem>>, vector<8x32xbf16>
    %c0_2 = arith.constant 0 : index
    %c0_3 = arith.constant 0 : index
    %4 = vector.load %arg3[%c0_2, %c0_3] : memref<32x128xbf16, #tpu.memory_space<vmem>>, vector<32x128xbf16>
    %cst = arith.constant dense<0.000000e+00> : vector<8x128xf32>
    %5 = tpu.matmul %3, %4, %cst {dimension_numbers = #tpu.dot_dimension_numbers<[1], [0], [0], [1], [0, 0, 1, 1], [], []>} : vector<8x32xbf16>, vector<32x128xbf16>, vector<8x128xf32> -> vector<8x128xf32>
    %c0_4 = arith.constant 0 : index
    %c0_5 = arith.constant 0 : index
    %6 = vector.load %arg4[%c0_4, %c0_5] : memref<1x128xf32, #tpu.memory_space<vmem>>, vector<1x128xf32>
    %7 = vector.broadcast %6 : vector<1x128xf32> to vector<8x128xf32>
    %8 = arith.addf %5, %7 : vector<8x128xf32>
    %cst_6 = arith.constant 0.000000e+00 : f32
    %9 = vector.broadcast %cst_6 : f32 to vector<8x128xf32>
    %10 = arith.maximumf %8, %9 : vector<8x128xf32>
    %c0_7 = arith.constant 0 : index
    %c0_8 = arith.constant 0 : index
    %11 = vector.load %arg8[%c0_7, %c0_8] : memref<8x128xf32, #tpu.memory_space<vmem>>, vector<8x128xf32>
    %12 = arith.truncf %10 : vector<8x128xf32> to vector<8x128xbf16>
    %c0_9 = arith.constant 0 : index
    %c0_10 = arith.constant 0 : index
    %13 = vector.load %arg5[%c0_9, %c0_10] : memref<128x128xbf16, #tpu.memory_space<vmem>>, vector<128x128xbf16>
    %cst_11 = arith.constant dense<0.000000e+00> : vector<8x128xf32>
    %14 = tpu.matmul %12, %13, %cst_11 {dimension_numbers = #tpu.dot_dimension_numbers<[1], [0], [0], [1], [0, 0, 1, 1], [], []>} : vector<8x128xbf16>, vector<128x128xbf16>, vector<8x128xf32> -> vector<8x128xf32>
    %15 = arith.addf %11, %14 : vector<8x128xf32>
    %c0_12 = arith.constant 0 : index
    %c0_13 = arith.constant 0 : index
    %16 = vector.load %arg8[%c0_12, %c0_13] : memref<8x128xf32, #tpu.memory_space<vmem>>, vector<8x128xf32>
    tpu.vector_store %arg8[%c0_12, %c0_13], %15 {strides = array<i32>} : memref<8x128xf32, #tpu.memory_space<vmem>>, vector<8x128xf32>,
    %c0_i32_14 = arith.constant 0 : i32
    %17 = arith.cmpi eq, %arg1, %c0_i32_14 : i32
    %18 = arith.extui %17 : i1 to i32
    %c0_i32_15 = arith.constant 0 : i32
    %19 = arith.cmpi ne, %18, %c0_i32_15 : i32
    scf.if %19 {
      %c0_16 = arith.constant 0 : index
      %c0_17 = arith.constant 0 : index
      %20 = vector.load %arg8[%c0_16, %c0_17] : memref<8x128xf32, #tpu.memory_space<vmem>>, vector<8x128xf32>
      %c0_18 = arith.constant 0 : index
      %c0_19 = arith.constant 0 : index
      %21 = vector.load %arg6[%c0_18, %c0_19] : memref<1x128xf32, #tpu.memory_space<vmem>>, vector<1x128xf32>
      %22 = vector.broadcast %21 : vector<1x128xf32> to vector<8x128xf32>
      %23 = arith.addf %20, %22 : vector<8x128xf32>
      %c0_20 = arith.constant 0 : index
      %c0_21 = arith.constant 0 : index
      %24 = vector.load %arg7[%c0_20, %c0_21] : memref<8x128xf32, #tpu.memory_space<vmem>>, vector<8x128xf32>
      tpu.vector_store %arg7[%c0_20, %c0_21], %23 {strides = array<i32>} : memref<8x128xf32, #tpu.memory_space<vmem>>, vector<8x128xf32>,
    } else {
    }
    return
  }
  func.func @transform_0(%arg0: i32, %arg1: i32) -> (i32, i32) {
    %c0_i32 = arith.constant 0 : i32
    %c0_i32_0 = arith.constant 0 : i32
    return %arg0, %c0_i32 : i32, i32
  }
  func.func @transform_1(%arg0: i32, %arg1: i32) -> (i32, i32) {
    %c0_i32 = arith.constant 0 : i32
    %c0_i32_0 = arith.constant 0 : i32
    return %c0_i32, %arg1 : i32, i32
  }
  func.func @transform_2(%arg0: i32, %arg1: i32) -> (i32, i32) {
    %c0_i32 = arith.constant 0 : i32
    %c0_i32_0 = arith.constant 0 : i32
    return %c0_i32, %arg1 : i32, i32
  }
  func.func @transform_3(%arg0: i32, %arg1: i32) -> (i32, i32) {
    %c0_i32 = arith.constant 0 : i32
    %c0_i32_0 = arith.constant 0 : i32
    return %arg1, %c0_i32 : i32, i32
  }
  func.func @transform_4(%arg0: i32, %arg1: i32) -> (i32, i32) {
    %c0_i32 = arith.constant 0 : i32
    %c0_i32_0 = arith.constant 0 : i32
    %c0_i32_1 = arith.constant 0 : i32
    return %c0_i32, %c0_i32_0 : i32, i32
  }
  func.func @transform_5(%arg0: i32, %arg1: i32) -> (i32, i32) {
    %c0_i32 = arith.constant 0 : i32
    %c0_i32_0 = arith.constant 0 : i32
    return %arg0, %c0_i32 : i32, i32
  }
}

</mosaic_0001>

<llo_original>
// kernel: tpu_custom_call.1
$region0: #{tpu_custom_call.1}
  #allocation0 [shape = 'u32[]', space=smem, size = 0x4, offset = 0x4, fixed_abs, tag = 'smem constant byte address 0x4 - core index']
  #allocation1 [shape = 'u32[144,128]{1,0:T(1,128)}', space=vmem, size = 0x12000, scoped, tag = 'internal scratch']
  #allocation2 [shape = 'f32[8,128]{1,0:T(8,128)}', space=vmem, size = 0x1000, scoped, tag = 'scratch operand']
  %s0 = inlined_call_operand.hbm [shape: bf16[8,32], index: 0, kind: input, shape index: {}]
  %s1 = inlined_call_operand.hbm [shape: bf16[32,128], index: 1, kind: input, shape index: {}]
  %s2 = inlined_call_operand.vmem [shape: f32[1,128], index: 2, kind: input, shape index: {}]
  %s3 = inlined_call_operand.hbm [shape: bf16[128,128], index: 3, kind: input, shape index: {}]
  %s4 = inlined_call_operand.vmem [shape: f32[1,128], index: 4, kind: input, shape index: {}]
  %s5 = inlined_call_operand.hbm [shape: f32[8,128], index: 5, kind: output, shape index: {}]
  %s6 = sld [smem:[#allocation0]]
  $region50: #{tpu_custom_call.1} parent=0
    _
  %s8 = ssub.s32 1, %s6
  %s9 = scalar_select 0, %s8, %s6
  $region1: #{tpu_custom_call.1} parent=0
    #allocation3 [shape = 'u8[2048]{0}', space=vmem, size = 0x800, scoped, tag = 'input window, operand 0, single buffered']
    #allocation4 [shape = 's32[1]{0}', space=sflag, size = 0x4, scoped, tag = 'scoped memory for tpu_custom_call.1']
    #allocation5 [shape = 's32[1]{0}', space=sflag, size = 0x4, scoped, tag = 'scoped memory for tpu_custom_call.1']
    #allocation6 [shape = 'u8[8192]{0}', space=vmem, size = 0x2000, scoped, tag = 'input window, operand 1, single buffered']
    #allocation7 [shape = 's32[1]{0}', space=sflag, size = 0x4, scoped, tag = 'scoped memory for tpu_custom_call.1']
    #allocation8 [shape = 'u8[32768]{0}', space=vmem, size = 0x8000, scoped, tag = 'input window, operand 3, single buffered']
    #allocation9 [shape = 'u8[4096]{0}', space=vmem, size = 0x1000, scoped, tag = 'output window, operand 0, single buffered']
    %10 = vsyncpa [#allocation4], 0
    %11 = vsyncpa [#allocation7], 0
    %12 = vsyncpa [#allocation5], 0
    // Predicated region
    $region2: #{tpu_custom_call.1} parent=1 // pred_check
      _
    $region3: #{tpu_custom_call.1} parent=1 // pred_check_branch
      %14 = sbr.rel (0) target = $region5
    $region4: #{tpu_custom_call.1} parent=1 // pred_region
      %s16 = ssub.s32 64, 64
      %17 = vsyncadd [#allocation4], %s16
      %s19 = sshll.u32 [#allocation3], 4
      %s20 = int_to_ptr.vmem [resolvable:$true] %s19
      %22 = dma.hbm_to_vmem [thread:$0]  %s0, 64, %s20, [#allocation4]
    $region5: #{tpu_custom_call.1} parent=1 // pred_fallthru
      _
    // Predicated region
    $region6: #{tpu_custom_call.1} parent=1 // pred_check
      _
    $region7: #{tpu_custom_call.1} parent=1 // pred_check_branch
      %24 = sbr.rel (0) target = $region9
    $region8: #{tpu_custom_call.1} parent=1 // pred_region
      %s26 = ssub.s32 256, 256
      %27 = vsyncadd [#allocation7], %s26
      %s28 = sshll.u32 [#allocation6], 4
      %s29 = int_to_ptr.vmem [resolvable:$true] %s28
      %34 = dma.hbm_to_vmem [thread:$0]  %s1, 256, %s29, [#allocation7], 64, 64, 4
    $region9: #{tpu_custom_call.1} parent=1 // pred_fallthru
      _
    // Predicated region
    $region10: #{tpu_custom_call.1} parent=1 // pred_check
      _
    $region11: #{tpu_custom_call.1} parent=1 // pred_check_branch
      %36 = sbr.rel (0) target = $region13
    $region12: #{tpu_custom_call.1} parent=1 // pred_region
      _
    $region13: #{tpu_custom_call.1} parent=1 // pred_fallthru
      _
    // Predicated region
    $region14: #{tpu_custom_call.1} parent=1 // pred_check
      _
    $region15: #{tpu_custom_call.1} parent=1 // pred_check_branch
      %38 = sbr.rel (0) target = $region17
    $region16: #{tpu_custom_call.1} parent=1 // pred_region
      %s40 = ssub.s32 1024, 1024
      %41 = vsyncadd [#allocation7], %s40
      %s42 = sshll.u32 [#allocation8], 4
      %s43 = int_to_ptr.vmem [resolvable:$true] %s42
      %48 = dma.hbm_to_vmem [thread:$0]  %s3, 1024, %s43, [#allocation7], 64, 64, 4
    $region17: #{tpu_custom_call.1} parent=1 // pred_fallthru
      _
    // Predicated region
    $region18: #{tpu_custom_call.1} parent=1 // pred_check
      _
    $region19: #{tpu_custom_call.1} parent=1 // pred_check_branch
      %50 = sbr.rel (0) target = $region21
    $region20: #{tpu_custom_call.1} parent=1 // pred_region
      _
    $region21: #{tpu_custom_call.1} parent=1 // pred_fallthru
      _
    // Predicated region
    $region22: #{tpu_custom_call.1} parent=1 // pred_check
      _
    $region23: #{tpu_custom_call.1} parent=1 // pred_check_branch
      %52 = sbr.rel (0) target = $region25
    $region24: #{tpu_custom_call.1} parent=1 // pred_region
      %53 = dma.done [#allocation4], 64
    $region25: #{tpu_custom_call.1} parent=1 // pred_fallthru
      _
    // Predicated region
    $region26: #{tpu_custom_call.1} parent=1 // pred_check
      _
    $region27: #{tpu_custom_call.1} parent=1 // pred_check_branch
      %55 = sbr.rel (0) target = $region29
    $region28: #{tpu_custom_call.1} parent=1 // pred_region
      %56 = dma.done [#allocation7], 256
    $region29: #{tpu_custom_call.1} parent=1 // pred_fallthru
      _
    // Predicated region
    $region30: #{tpu_custom_call.1} parent=1 // pred_check
      _
    $region31: #{tpu_custom_call.1} parent=1 // pred_check_branch
      %58 = sbr.rel (0) target = $region33
    $region32: #{tpu_custom_call.1} parent=1 // pred_region
      %59 = dma.done [#allocation7], 1024
    $region33: #{tpu_custom_call.1} parent=1 // pred_fallthru
      _
    %p61 = scmp.eq.s32.totalorder 0, 0
    // Predicated region
    $region34: #{tpu_custom_call.1} parent=1 // pred_check
      %p62 = pneg %p61
    $region35: #{tpu_custom_call.1} parent=1 // pred_check_branch
      %64 = sbr.rel (%p62) target = $region37
    $region36: #{tpu_custom_call.1} parent=1 // pred_region
      %65 = vst [vmem:[#allocation2] sm:$0xff] 0.0
    $region37: #{tpu_custom_call.1} parent=1 // pred_fallthru
      _
    %v66 = vld [vmem:[#allocation3] sm:$0xf]
    %v67 = vld [vmem:[#allocation6] sm:$0xf]
    %v68 = vld [vmem:[#allocation6 + $0x4] sm:$0xf]
    %v69 = vld [vmem:[#allocation6 + $0x8] sm:$0xf]
    %v70 = vld [vmem:[#allocation6 + $0xc] sm:$0xf]
    %v71 = vld [vmem:[%s2] sm:$0x1]
    %v73 = vlaneseq
    %v74 = vshrl.u32 %v73, 7
    %v75 = vsub.s32 0, %v74
    %v76 = vrot.slane %v71, %v75
    %v82 = vunpack.c.l.b16 %v67
    %v83 = vunpack.c.l.b16 %v68
    %v84 = vunpack.c.l.b16 %v69
    %v85 = vunpack.c.l.b16 %v70
    %v86 = vpack.c.b16 %v83, %v82
    %v87 = vpack.c.b16 %v85, %v84
    %vm90 = vcmask 261120
    %v92 = vsel %vm90, %v66, 0
    %94 = vmatprep.subr.bf16.mxu0 0
    %95 = vmatpush1.bf16.msra.mxu0 0
    %96 = vmatprep.subr.bf16.mxu0 0
    %97 = vmatpush1.bf16.msra.mxu0 0
    %98 = vmatprep.subr.bf16.mxu0 0
    %99 = vmatpush1.bf16.msra.mxu0 0
    %100 = vmatprep.subr.bf16.mxu0 0
    %101 = vmatpush1.bf16.msra.mxu0 0
    %102 = vmatprep.subr.bf16.mxu0 0
    %103 = vmatpush1.bf16.msra.mxu0 0
    %104 = vmatprep.subr.bf16.mxu0 0
    %105 = vmatpush1.bf16.msra.mxu0 0
    %106 = vmatprep.subr.bf16.mxu0 0
    %107 = vmatpush1.bf16.msra.mxu0 %v87
    %108 = vmatprep.subr.bf16.mxu0 0
    %109 = vmatpush1.bf16.msra.mxu0 %v86
    %110 = vmatprep.subr.bf16.mxu0 0
    %111 = vmatpush2.bf16.msra.mxu0 0
    %112 = vmatprep.subr.bf16.mxu0 0
    %113 = vmatpush2.bf16.msra.mxu0 0
    %114 = vmatprep.subr.bf16.mxu0 0
    %115 = vmatpush2.bf16.msra.mxu0 0
    %116 = vmatprep.subr.bf16.mxu0 0
    %117 = vmatpush2.bf16.msra.mxu0 0
    %118 = vmatprep.subr.bf16.mxu0 0
    %119 = vmatpush2.bf16.msra.mxu0 0
    %120 = vmatprep.subr.bf16.mxu0 0
    %121 = vmatpush2.bf16.msra.mxu0 0
    %122 = vmatprep.subr.bf16.mxu0 0
    %123 = vmatpush2.bf16.msra.mxu0 0
    %124 = vmatprep.subr.bf16.mxu0 0
    %125 = vmatpush2.bf16.msra.mxu0 0
    %126 = vmatprep.mubr.bf16.mxu0 0
    %127 = vmatmul.mubr.bf16.gmra.mxu0 %v92
    %v128 = vpop.f32.mrf.mxu0
    %v129 = vadd.f32 %v76, %v128
    %v130 = vpop.f32.mrf.mxu0
    %v131 = vpop.f32.mrf.mxu0
    %v132 = vpop.f32.mrf.mxu0
    %133 = vdwg.mxu0
    %v134 = vmax.f32 %v129, 0.0
    %v135 = vld [vmem:[#allocation2] sm:$0xff]
    %v136 = vpack.c.bf16 %v134, %v134
    %v137 = vld [vmem:[#allocation8] sm:$0xf]
    %v138 = vld [vmem:[#allocation8 + $0x4] sm:$0xf]
    %v139 = vld [vmem:[#allocation8 + $0x8] sm:$0xf]
    %v140 = vld [vmem:[#allocation8 + $0xc] sm:$0xf]
    %v141 = vld [vmem:[#allocation8 + $0x10] sm:$0xf]
    %v142 = vld [vmem:[#allocation8 + $0x14] sm:$0xf]
    %v143 = vld [vmem:[#allocation8 + $0x18] sm:$0xf]
    %v144 = vld [vmem:[#allocation8 + $0x1c] sm:$0xf]
    %v145 = vld [vmem:[#allocation8 + $0x20] sm:$0xf]
    %v146 = vld [vmem:[#allocation8 + $0x24] sm:$0xf]
    %v147 = vld [vmem:[#allocation8 + $0x28] sm:$0xf]
    %v148 = vld [vmem:[#allocation8 + $0x2c] sm:$0xf]
    %v149 = vld [vmem:[#allocation8 + $0x30] sm:$0xf]
    %v150 = vld [vmem:[#allocation8 + $0x34] sm:$0xf]
    %v151 = vld [vmem:[#allocation8 + $0x38] sm:$0xf]
    %v152 = vld [vmem:[#allocation8 + $0x3c] sm:$0xf]
    %v169 = vunpack.c.l.b16 %v137
    %v170 = vunpack.c.l.b16 %v138
    %v171 = vunpack.c.l.b16 %v139
    %v172 = vunpack.c.l.b16 %v140
    %v173 = vunpack.c.l.b16 %v141
    %v174 = vunpack.c.l.b16 %v142
    %v175 = vunpack.c.l.b16 %v143
    %v176 = vunpack.c.l.b16 %v144
    %v177 = vunpack.c.l.b16 %v145
    %v178 = vunpack.c.l.b16 %v146
    %v179 = vunpack.c.l.b16 %v147
    %v180 = vunpack.c.l.b16 %v148
    %v181 = vunpack.c.l.b16 %v149
    %v182 = vunpack.c.l.b16 %v150
    %v183 = vunpack.c.l.b16 %v151
    %v184 = vunpack.c.l.b16 %v152
    %v185 = vpack.c.b16 %v170, %v169
    %v186 = vpack.c.b16 %v172, %v171
    %v187 = vpack.c.b16 %v174, %v173
    %v188 = vpack.c.b16 %v176, %v175
    %v189 = vpack.c.b16 %v178, %v177
    %v190 = vpack.c.b16 %v180, %v179
    %v191 = vpack.c.b16 %v182, %v181
    %v192 = vpack.c.b16 %v184, %v183
    %201 = vmatprep.subr.bf16.mxu0 0
    %202 = vmatpush1.bf16.msra.mxu0 %v192
    %203 = vmatprep.subr.bf16.mxu0 0
    %204 = vmatpush1.bf16.msra.mxu0 %v191
    %205 = vmatprep.subr.bf16.mxu0 0
    %206 = vmatpush1.bf16.msra.mxu0 %v190
    %207 = vmatprep.subr.bf16.mxu0 0
    %208 = vmatpush1.bf16.msra.mxu0 %v189
    %209 = vmatprep.subr.bf16.mxu0 0
    %210 = vmatpush1.bf16.msra.mxu0 %v188
    %211 = vmatprep.subr.bf16.mxu0 0
    %212 = vmatpush1.bf16.msra.mxu0 %v187
    %213 = vmatprep.subr.bf16.mxu0 0
    %214 = vmatpush1.bf16.msra.mxu0 %v186
    %215 = vmatprep.subr.bf16.mxu0 0
    %216 = vmatpush1.bf16.msra.mxu0 %v185
    %217 = vmatprep.subr.bf16.mxu0 0
    %218 = vmatpush2.bf16.msra.mxu0 0
    %219 = vmatprep.subr.bf16.mxu0 0
    %220 = vmatpush2.bf16.msra.mxu0 0
    %221 = vmatprep.subr.bf16.mxu0 0
    %222 = vmatpush2.bf16.msra.mxu0 0
    %223 = vmatprep.subr.bf16.mxu0 0
    %224 = vmatpush2.bf16.msra.mxu0 0
    %225 = vmatprep.subr.bf16.mxu0 0
    %226 = vmatpush2.bf16.msra.mxu0 0
    %227 = vmatprep.subr.bf16.mxu0 0
    %228 = vmatpush2.bf16.msra.mxu0 0
    %229 = vmatprep.subr.bf16.mxu0 0
    %230 = vmatpush2.bf16.msra.mxu0 0
    %231 = vmatprep.subr.bf16.mxu0 0
    %232 = vmatpush2.bf16.msra.mxu0 0
    %233 = vmatprep.mubr.bf16.mxu0 0
    %234 = vmatmul.mubr.bf16.gmra.mxu0 %v136
    %v235 = vpop.f32.mrf.mxu0
    %v236 = vadd.f32 0.0, %v235
    %v237 = vpop.f32.mrf.mxu0
    %v238 = vpop.f32.mrf.mxu0
    %v239 = vpop.f32.mrf.mxu0
    %240 = vdwg.mxu0
    %v241 = vadd.f32 %v135, %v236
    %242 = vst [vmem:[#allocation2] sm:$0xff] %v241
    // Predicated region
    $region38: #{tpu_custom_call.1} parent=1 // pred_check
      %p243 = pneg %p61
    $region39: #{tpu_custom_call.1} parent=1 // pred_check_branch
      %245 = sbr.rel (%p243) target = $region41
    $region40: #{tpu_custom_call.1} parent=1 // pred_region
      %v246 = vld [vmem:[#allocation2] sm:$0xff]
      %v247 = vld [vmem:[%s4] sm:$0x1]
      %v249 = vlaneseq
      %v250 = vshrl.u32 %v249, 7
      %v251 = vsub.s32 0, %v250
      %v252 = vrot.slane %v247, %v251
      %v254 = vadd.f32 %v246, %v252
      %255 = vst [vmem:[#allocation9] sm:$0xff] %v254
    $region41: #{tpu_custom_call.1} parent=1 // pred_fallthru
      _
    // Predicated region
    $region42: #{tpu_custom_call.1} parent=1 // pred_check
      _
    $region43: #{tpu_custom_call.1} parent=1 // pred_check_branch
      %257 = sbr.rel (0) target = $region45
    $region44: #{tpu_custom_call.1} parent=1 // pred_region
      %s259 = ssub.s32 128, 128
      %260 = vsyncadd [#allocation5], %s259
      %s262 = sshll.u32 [#allocation9], 4
      %s263 = int_to_ptr.vmem [resolvable:$true] %s262
      %265 = dma.vmem_to_hbm [thread:$0]  %s263, 128, %s5, [#allocation5]
    $region45: #{tpu_custom_call.1} parent=1 // pred_fallthru
      _
    // Predicated region
    $region46: #{tpu_custom_call.1} parent=1 // pred_check
      _
    $region47: #{tpu_custom_call.1} parent=1 // pred_check_branch
      %267 = sbr.rel (0) target = $region49
    $region48: #{tpu_custom_call.1} parent=1 // pred_region
      %268 = dma.done [#allocation5], 128
    $region49: #{tpu_custom_call.1} parent=1 // pred_fallthru
      _
    %269 = vsyncpa [#allocation4], 1
    %270 = vsyncpa [#allocation7], 1
    %271 = vsyncpa [#allocation5], 1

// kernel: tpu_custom_call.1
$region0: #{tpu_custom_call.1}
  #allocation0 [shape = 'u32[]', space=smem, size = 0x4, offset = 0x4, fixed_abs, tag = 'smem constant byte address 0x4 - core index']
  #allocation1 [shape = 'u32[144,128]{1,0:T(1,128)}', space=vmem, size = 0x12000, scoped, tag = 'internal scratch']
  #allocation2 [shape = 'f32[8,128]{1,0:T(8,128)}', space=vmem, size = 0x1000, scoped, tag = 'scratch operand']
  %s0 = inlined_call_operand.hbm [shape: bf16[8,32], index: 0, kind: input, shape index: {}]
  %s1 = inlined_call_operand.hbm [shape: bf16[32,128], index: 1, kind: input, shape index: {}]
  %s2 = inlined_call_operand.vmem [shape: f32[1,128], index: 2, kind: input, shape index: {}]
  %s3 = inlined_call_operand.hbm [shape: bf16[128,128], index: 3, kind: input, shape index: {}]
  %s4 = inlined_call_operand.vmem [shape: f32[1,128], index: 4, kind: input, shape index: {}]
  %s5 = inlined_call_operand.hbm [shape: f32[8,128], index: 5, kind: output, shape index: {}]
  %s6 = sld [smem:[#allocation0]]
  $region50: #{tpu_custom_call.1} parent=0
    _
  %s8 = ssub.s32 1, %s6
  %s9 = scalar_select 0, %s8, %s6
  $region1: #{tpu_custom_call.1} parent=0
    #allocation3 [shape = 'u8[2048]{0}', space=vmem, size = 0x800, scoped, tag = 'input window, operand 0, single buffered']
    #allocation4 [shape = 's32[1]{0}', space=sflag, size = 0x4, scoped, tag = 'scoped memory for tpu_custom_call.1']
    #allocation5 [shape = 's32[1]{0}', space=sflag, size = 0x4, scoped, tag = 'scoped memory for tpu_custom_call.1']
    #allocation6 [shape = 'u8[8192]{0}', space=vmem, size = 0x2000, scoped, tag = 'input window, operand 1, single buffered']
    #allocation7 [shape = 's32[1]{0}', space=sflag, size = 0x4, scoped, tag = 'scoped memory for tpu_custom_call.1']
    #allocation8 [shape = 'u8[32768]{0}', space=vmem, size = 0x8000, scoped, tag = 'input window, operand 3, single buffered']
    #allocation9 [shape = 'u8[4096]{0}', space=vmem, size = 0x1000, scoped, tag = 'output window, operand 0, single buffered']
    %10 = vsyncpa [#allocation4], 0
    %11 = vsyncpa [#allocation7], 0
    %12 = vsyncpa [#allocation5], 0
    // Predicated region
    $region2: #{tpu_custom_call.1} parent=1 // pred_check
      _
    $region3: #{tpu_custom_call.1} parent=1 // pred_check_branch
      %14 = sbr.rel (0) target = $region5
    $region4: #{tpu_custom_call.1} parent=1 // pred_region
      %s16 = ssub.s32 64, 64
      %17 = vsyncadd [#allocation4], %s16
      %s19 = sshll.u32 [#allocation3], 4
      %s20 = int_to_ptr.vmem [resolvable:$true] %s19
      %22 = dma.hbm_to_vmem [thread:$0]  %s0, 64, %s20, [#allocation4]
    $region5: #{tpu_custom_call.1} parent=1 // pred_fallthru
      _
    // Predicated region
    $region6: #{tpu_custom_call.1} parent=1 // pred_check
      _
    $region7: #{tpu_custom_call.1} parent=1 // pred_check_branch
      %24 = sbr.rel (0) target = $region9
    $region8: #{tpu_custom_call.1} parent=1 // pred_region
      %s26 = ssub.s32 256, 256
      %27 = vsyncadd [#allocation7], %s26
      %s28 = sshll.u32 [#allocation6], 4
      %s29 = int_to_ptr.vmem [resolvable:$true] %s28
      %34 = dma.hbm_to_vmem [thread:$0]  %s1, 256, %s29, [#allocation7], 64, 64, 4
    $region9: #{tpu_custom_call.1} parent=1 // pred_fallthru
      _
    // Predicated region
    $region10: #{tpu_custom_call.1} parent=1 // pred_check
      _
    $region11: #{tpu_custom_call.1} parent=1 // pred_check_branch
      %36 = sbr.rel (0) target = $region13
    $region12: #{tpu_custom_call.1} parent=1 // pred_region
      _
    $region13: #{tpu_custom_call.1} parent=1 // pred_fallthru
      _
    // Predicated region
    $region14: #{tpu_custom_call.1} parent=1 // pred_check
      _
    $region15: #{tpu_custom_call.1} parent=1 // pred_check_branch
      %38 = sbr.rel (0) target = $region17
    $region16: #{tpu_custom_call.1} parent=1 // pred_region
      %s40 = ssub.s32 1024, 1024
      %41 = vsyncadd [#allocation7], %s40
      %s42 = sshll.u32 [#allocation8], 4
      %s43 = int_to_ptr.vmem [resolvable:$true] %s42
      %48 = dma.hbm_to_vmem [thread:$0]  %s3, 1024, %s43, [#allocation7], 64, 64, 4
    $region17: #{tpu_custom_call.1} parent=1 // pred_fallthru
      _
    // Predicated region
    $region18: #{tpu_custom_call.1} parent=1 // pred_check
      _
    $region19: #{tpu_custom_call.1} parent=1 // pred_check_branch
      %50 = sbr.rel (0) target = $region21
    $region20: #{tpu_custom_call.1} parent=1 // pred_region
      _
    $region21: #{tpu_custom_call.1} parent=1 // pred_fallthru
      _
    // Predicated region
    $region22: #{tpu_custom_call.1} parent=1 // pred_check
      _
    $region23: #{tpu_custom_call.1} parent=1 // pred_check_branch
      %52 = sbr.rel (0) target = $region25
    $region24: #{tpu_custom_call.1} parent=1 // pred_region
      %53 = dma.done [#allocation4], 64
    $region25: #{tpu_custom_call.1} parent=1 // pred_fallthru
      _
    // Predicated region
    $region26: #{tpu_custom_call.1} parent=1 // pred_check
      _
    $region27: #{tpu_custom_call.1} parent=1 // pred_check_branch
      %55 = sbr.rel (0) target = $region29
    $region28: #{tpu_custom_call.1} parent=1 // pred_region
      %56 = dma.done [#allocation7], 256
    $region29: #{tpu_custom_call.1} parent=1 // pred_fallthru
      _
    // Predicated region
    $region30: #{tpu_custom_call.1} parent=1 // pred_check
      _
    $region31: #{tpu_custom_call.1} parent=1 // pred_check_branch
      %58 = sbr.rel (0) target = $region33
    $region32: #{tpu_custom_call.1} parent=1 // pred_region
      %59 = dma.done [#allocation7], 1024
    $region33: #{tpu_custom_call.1} parent=1 // pred_fallthru
      _
    %p61 = scmp.eq.s32.totalorder 0, 0
    // Predicated region
    $region34: #{tpu_custom_call.1} parent=1 // pred_check
      %p62 = pneg %p61
    $region35: #{tpu_custom_call.1} parent=1 // pred_check_branch
      %64 = sbr.rel (%p62) target = $region37
    $region36: #{tpu_custom_call.1} parent=1 // pred_region
      %65 = vst [vmem:[#allocation2] sm:$0xff] 0.0
    $region37: #{tpu_custom_call.1} parent=1 // pred_fallthru
      _
    %v66 = vld [vmem:[#allocation3] sm:$0xf]
    %v67 = vld [vmem:[#allocation6] sm:$0xf]
    %v68 = vld [vmem:[#allocation6 + $0x4] sm:$0xf]
    %v69 = vld [vmem:[#allocation6 + $0x8] sm:$0xf]
    %v70 = vld [vmem:[#allocation6 + $0xc] sm:$0xf]
    %v71 = vld [vmem:[%s2] sm:$0x1]
    %v73 = vlaneseq
    %v74 = vshrl.u32 %v73, 7
    %v75 = vsub.s32 0, %v74
    %v76 = vrot.slane %v71, %v75
    %v82 = vunpack.c.l.b16 %v67
    %v83 = vunpack.c.l.b16 %v68
    %v84 = vunpack.c.l.b16 %v69
    %v85 = vunpack.c.l.b16 %v70
    %v86 = vpack.c.b16 %v83, %v82
    %v87 = vpack.c.b16 %v85, %v84
    %vm90 = vcmask 261120
    %v92 = vsel %vm90, %v66, 0
    %94 = vmatprep.subr.bf16.mxu0 0
    %95 = vmatpush1.bf16.msra.mxu0 0
    %96 = vmatprep.subr.bf16.mxu0 0
    %97 = vmatpush1.bf16.msra.mxu0 0
    %98 = vmatprep.subr.bf16.mxu0 0
    %99 = vmatpush1.bf16.msra.mxu0 0
    %100 = vmatprep.subr.bf16.mxu0 0
    %101 = vmatpush1.bf16.msra.mxu0 0
    %102 = vmatprep.subr.bf16.mxu0 0
    %103 = vmatpush1.bf16.msra.mxu0 0
    %104 = vmatprep.subr.bf16.mxu0 0
    %105 = vmatpush1.bf16.msra.mxu0 0
    %106 = vmatprep.subr.bf16.mxu0 0
    %107 = vmatpush1.bf16.msra.mxu0 %v87
    %108 = vmatprep.subr.bf16.mxu0 0
    %109 = vmatpush1.bf16.msra.mxu0 %v86
    %110 = vmatprep.subr.bf16.mxu0 0
    %111 = vmatpush2.bf16.msra.mxu0 0
    %112 = vmatprep.subr.bf16.mxu0 0
    %113 = vmatpush2.bf16.msra.mxu0 0
    %114 = vmatprep.subr.bf16.mxu0 0
    %115 = vmatpush2.bf16.msra.mxu0 0
    %116 = vmatprep.subr.bf16.mxu0 0
    %117 = vmatpush2.bf16.msra.mxu0 0
    %118 = vmatprep.subr.bf16.mxu0 0
    %119 = vmatpush2.bf16.msra.mxu0 0
    %120 = vmatprep.subr.bf16.mxu0 0
    %121 = vmatpush2.bf16.msra.mxu0 0
    %122 = vmatprep.subr.bf16.mxu0 0
    %123 = vmatpush2.bf16.msra.mxu0 0
    %124 = vmatprep.subr.bf16.mxu0 0
    %125 = vmatpush2.bf16.msra.mxu0 0
    %126 = vmatprep.mubr.bf16.mxu0 0
    %127 = vmatmul.mubr.bf16.gmra.mxu0 %v92
    %v128 = vpop.f32.mrf.mxu0
    %v129 = vadd.f32 %v76, %v128
    %v130 = vpop.f32.mrf.mxu0
    %v131 = vpop.f32.mrf.mxu0
    %v132 = vpop.f32.mrf.mxu0
    %133 = vdwg.mxu0
    %v134 = vmax.f32 %v129, 0.0
    %v135 = vld [vmem:[#allocation2] sm:$0xff]
    %v136 = vpack.c.bf16 %v134, %v134
    %v137 = vld [vmem:[#allocation8] sm:$0xf]
    %v138 = vld [vmem:[#allocation8 + $0x4] sm:$0xf]
    %v139 = vld [vmem:[#allocation8 + $0x8] sm:$0xf]
    %v140 = vld [vmem:[#allocation8 + $0xc] sm:$0xf]
    %v141 = vld [vmem:[#allocation8 + $0x10] sm:$0xf]
    %v142 = vld [vmem:[#allocation8 + $0x14] sm:$0xf]
    %v143 = vld [vmem:[#allocation8 + $0x18] sm:$0xf]
    %v144 = vld [vmem:[#allocation8 + $0x1c] sm:$0xf]
    %v145 = vld [vmem:[#allocation8 + $0x20] sm:$0xf]
    %v146 = vld [vmem:[#allocation8 + $0x24] sm:$0xf]
    %v147 = vld [vmem:[#allocation8 + $0x28] sm:$0xf]
    %v148 = vld [vmem:[#allocation8 + $0x2c] sm:$0xf]
    %v149 = vld [vmem:[#allocation8 + $0x30] sm:$0xf]
    %v150 = vld [vmem:[#allocation8 + $0x34] sm:$0xf]
    %v151 = vld [vmem:[#allocation8 + $0x38] sm:$0xf]
    %v152 = vld [vmem:[#allocation8 + $0x3c] sm:$0xf]
    %v169 = vunpack.c.l.b16 %v137
    %v170 = vunpack.c.l.b16 %v138
    %v171 = vunpack.c.l.b16 %v139
    %v172 = vunpack.c.l.b16 %v140
    %v173 = vunpack.c.l.b16 %v141
    %v174 = vunpack.c.l.b16 %v142
    %v175 = vunpack.c.l.b16 %v143
    %v176 = vunpack.c.l.b16 %v144
    %v177 = vunpack.c.l.b16 %v145
    %v178 = vunpack.c.l.b16 %v146
    %v179 = vunpack.c.l.b16 %v147
    %v180 = vunpack.c.l.b16 %v148
    %v181 = vunpack.c.l.b16 %v149
    %v182 = vunpack.c.l.b16 %v150
    %v183 = vunpack.c.l.b16 %v151
    %v184 = vunpack.c.l.b16 %v152
    %v185 = vpack.c.b16 %v170, %v169
    %v186 = vpack.c.b16 %v172, %v171
    %v187 = vpack.c.b16 %v174, %v173
    %v188 = vpack.c.b16 %v176, %v175
    %v189 = vpack.c.b16 %v178, %v177
    %v190 = vpack.c.b16 %v180, %v179
    %v191 = vpack.c.b16 %v182, %v181
    %v192 = vpack.c.b16 %v184, %v183
    %201 = vmatprep.subr.bf16.mxu0 0
    %202 = vmatpush1.bf16.msra.mxu0 %v192
    %203 = vmatprep.subr.bf16.mxu0 0
    %204 = vmatpush1.bf16.msra.mxu0 %v191
    %205 = vmatprep.subr.bf16.mxu0 0
    %206 = vmatpush1.bf16.msra.mxu0 %v190
    %207 = vmatprep.subr.bf16.mxu0 0
    %208 = vmatpush1.bf16.msra.mxu0 %v189
    %209 = vmatprep.subr.bf16.mxu0 0
    %210 = vmatpush1.bf16.msra.mxu0 %v188
    %211 = vmatprep.subr.bf16.mxu0 0
    %212 = vmatpush1.bf16.msra.mxu0 %v187
    %213 = vmatprep.subr.bf16.mxu0 0
    %214 = vmatpush1.bf16.msra.mxu0 %v186
    %215 = vmatprep.subr.bf16.mxu0 0
    %216 = vmatpush1.bf16.msra.mxu0 %v185
    %217 = vmatprep.subr.bf16.mxu0 0
    %218 = vmatpush2.bf16.msra.mxu0 0
    %219 = vmatprep.subr.bf16.mxu0 0
    %220 = vmatpush2.bf16.msra.mxu0 0
    %221 = vmatprep.subr.bf16.mxu0 0
    %222 = vmatpush2.bf16.msra.mxu0 0
    %223 = vmatprep.subr.bf16.mxu0 0
    %224 = vmatpush2.bf16.msra.mxu0 0
    %225 = vmatprep.subr.bf16.mxu0 0
    %226 = vmatpush2.bf16.msra.mxu0 0
    %227 = vmatprep.subr.bf16.mxu0 0
    %228 = vmatpush2.bf16.msra.mxu0 0
    %229 = vmatprep.subr.bf16.mxu0 0
    %230 = vmatpush2.bf16.msra.mxu0 0
    %231 = vmatprep.subr.bf16.mxu0 0
    %232 = vmatpush2.bf16.msra.mxu0 0
    %233 = vmatprep.mubr.bf16.mxu0 0
    %234 = vmatmul.mubr.bf16.gmra.mxu0 %v136
    %v235 = vpop.f32.mrf.mxu0
    %v236 = vadd.f32 0.0, %v235
    %v237 = vpop.f32.mrf.mxu0
    %v238 = vpop.f32.mrf.mxu0
    %v239 = vpop.f32.mrf.mxu0
    %240 = vdwg.mxu0
    %v241 = vadd.f32 %v135, %v236
    %242 = vst [vmem:[#allocation2] sm:$0xff] %v241
    // Predicated region
    $region38: #{tpu_custom_call.1} parent=1 // pred_check
      %p243 = pneg %p61
    $region39: #{tpu_custom_call.1} parent=1 // pred_check_branch
      %245 = sbr.rel (%p243) target = $region41
    $region40: #{tpu_custom_call.1} parent=1 // pred_region
      %v246 = vld [vmem:[#allocation2] sm:$0xff]
      %v247 = vld [vmem:[%s4] sm:$0x1]
      %v249 = vlaneseq
      %v250 = vshrl.u32 %v249, 7
      %v251 = vsub.s32 0, %v250
      %v252 = vrot.slane %v247, %v251
      %v254 = vadd.f32 %v246, %v252
      %255 = vst [vmem:[#allocation9] sm:$0xff] %v254
    $region41: #{tpu_custom_call.1} parent=1 // pred_fallthru
      _
    // Predicated region
    $region42: #{tpu_custom_call.1} parent=1 // pred_check
      _
    $region43: #{tpu_custom_call.1} parent=1 // pred_check_branch
      %257 = sbr.rel (0) target = $region45
    $region44: #{tpu_custom_call.1} parent=1 // pred_region
      %s259 = ssub.s32 128, 128
      %260 = vsyncadd [#allocation5], %s259
      %s262 = sshll.u32 [#allocation9], 4
      %s263 = int_to_ptr.vmem [resolvable:$true] %s262
      %265 = dma.vmem_to_hbm [thread:$0]  %s263, 128, %s5, [#allocation5]
    $region45: #{tpu_custom_call.1} parent=1 // pred_fallthru
      _
    // Predicated region
    $region46: #{tpu_custom_call.1} parent=1 // pred_check
      _
    $region47: #{tpu_custom_call.1} parent=1 // pred_check_branch
      %267 = sbr.rel (0) target = $region49
    $region48: #{tpu_custom_call.1} parent=1 // pred_region
      %268 = dma.done [#allocation5], 128
    $region49: #{tpu_custom_call.1} parent=1 // pred_fallthru
      _
    %269 = vsyncpa [#allocation4], 1
    %270 = vsyncpa [#allocation7], 1
    %271 = vsyncpa [#allocation5], 1

</llo_original>
